<compile_context>
chip_gen: v6e
topology: v6e:2x2x1
jax: 0.10.0
libtpu: 0.0.40
codegen_flags: <defaults>
</compile_context>

<pallas_src>
import math

import jax
import jax.numpy as jnp
from jax.experimental import pallas as pl
from jax.experimental.pallas import tpu as pltpu


_LANES = 128            # output lanes per block (multiple of 128 -> unmasked stores)
_MAX_BLOCK_ROWS = 2048  # rows per block; ~20 MiB worst-case VMEM incl. double buffering


def _round_up(x, m):
    return ((x + m - 1) // m) * m


def _amplitude_kernel(x_ref, d_ref, o_ref):
    """x_ref: (tm, 2L) interleaved [re, im, ...] ;  d_ref: (2L, L) bf16 with
    D[2j, j] = +1, D[2j+1, j] = -1 ;  o_ref: (tm, L) = |re^2 - im^2|."""
    x = x_ref[...].astype(jnp.float32)
    sq = x * x                                   # re^2 / im^2, still lane-interleaved

    # Exact(-enough) f32 pair-difference through the bf16 MXU: Dekker-style 3-way split
    # of sq (hand-rolled bf16x3).  Residual error ~2^-24 relative to the squares.
    hi = sq.astype(jnp.bfloat16)
    r1 = sq - hi.astype(jnp.float32)             # exact (Sterbenz)
    mid = r1.astype(jnp.bfloat16)
    lo = (r1 - mid.astype(jnp.float32)).astype(jnp.bfloat16)

    d = d_ref[...]                               # +/-1 selector, exact in bf16
    acc = jnp.dot(hi, d, preferred_element_type=jnp.float32)
    acc = acc + jnp.dot(mid, d, preferred_element_type=jnp.float32)
    acc = acc + jnp.dot(lo, d, preferred_element_type=jnp.float32)

    o_ref[...] = jnp.abs(acc).astype(o_ref.dtype)


def amplitude(inputs):
    """JAX/Pallas equivalent of Amplitude.forward: |x[...,0]^2 - x[...,1]^2|."""
    assert inputs.shape[-1] == 2, "Tensor needs real and imag in the last rank..."
    out_shape = inputs.shape[:-1]
    n_out = math.prod(out_shape)
    if n_out == 0:
        return jnp.zeros(out_shape, dtype=inputs.dtype)

    L = _LANES
    itemsize = jnp.dtype(inputs.dtype).itemsize
    align = 8 * (4 // itemsize)                  # sublane alignment: 8 (f32) / 16 (bf16)

    rows = pl.cdiv(n_out, L)
    rows_arr = max(rows, align)                  # only tiny inputs get row padding
    pad_pairs = rows_arr * L - n_out             # <=127 pairs for lane-aligned row counts

    flat = inputs.reshape(-1)                    # contiguous view; no extra HBM pass
    if pad_pairs:                                # pad only the small lane/row tail
        flat = jnp.pad(flat, (0, 2 * pad_pairs))
    x2 = flat.reshape(rows_arr, 2 * L)           # lane-dense interleaved slab

    # Row tile: (8,128)-aligned, capped for VMEM, and >=2 grid blocks whenever possible
    # so the "parallel" axis can shard across v7x's two TensorCores (and single-TC chips
    # still overlap DMA with compute).  Ragged last blocks are masked by Pallas.
    tm = min(_MAX_BLOCK_ROWS,
             max(align, _round_up(pl.cdiv(rows_arr, 2), align)))
    grid = (pl.cdiv(rows_arr, tm),)

    # +/-1 pair-difference matrix, resident in VMEM across all grid steps.
    r_idx = jnp.arange(2 * L)[:, None]
    c_idx = jnp.arange(L)[None, :]
    d = (jnp.where(r_idx == 2 * c_idx, 1.0, 0.0)
         - jnp.where(r_idx == 2 * c_idx + 1, 1.0, 0.0)).astype(jnp.bfloat16)

    out2 = pl.pallas_call(
        _amplitude_kernel,
        out_shape=jax.ShapeDtypeStruct((rows_arr, L), inputs.dtype),
        grid=grid,
        in_specs=[
            pl.BlockSpec((tm, 2 * L), lambda i: (i, 0)),
            pl.BlockSpec((2 * L, L), lambda i: (0, 0)),   # constant block -> fetched once
        ],
        out_specs=pl.BlockSpec((tm, L), lambda i: (i, 0)),
        compiler_params=pltpu.CompilerParams(
            dimension_semantics=("parallel",),            # megacore sharding on v7x
            vmem_limit_bytes=32 * 1024 * 1024),           # covers v5e's 16 MiB default
    )(x2, d)

    flat_out = out2.reshape(-1)
    if pad_pairs:
        flat_out = flat_out[:n_out]
    return flat_out.reshape(out_shape)


def _reference(inputs):
    return jnp.abs(inputs[..., 0] ** 2 - inputs[..., 1] ** 2)


if __name__ == "__main__":
    key = jax.random.PRNGKey(0)
    # Small shape consistent with the module: (batch=2, channels=4, time=16, 2)
    x = jax.random.normal(key, (2, 4, 16, 2), dtype=jnp.float32)

    amp = jax.jit(amplitude)
    out = jax.block_until_ready(amp(x))
    ref = _reference(x)
    assert out.shape == x.shape[:-1]
    assert jnp.allclose(out, ref, atol=1e-5, rtol=1e-5)

    # Exercise the ragged (non-multiple-of-128, multi-block, masked last block) path.
    x_ragged = jax.random.normal(jax.random.PRNGKey(1), (2, 4, 1000, 2), dtype=jnp.float32)
    out_ragged = jax.block_until_ready(jax.jit(amplitude)(x_ragged))
    assert out_ragged.shape == x_ragged.shape[:-1]
    assert jnp.allclose(out_ragged, _reference(x_ragged), atol=1e-5, rtol=1e-5)

    print("KERNEL_OK")
</pallas_src>

<mosaic_0001>
module attributes {stable_mosaic.version = 11 : i64} {
  func.func @_amplitude_kernel(%arg0: i32, %arg1: memref<8x256xf32, #tpu.memory_space<vmem>>, %arg2: memref<256x128xbf16, #tpu.memory_space<vmem>>, %arg3: memref<8x128xf32, #tpu.memory_space<vmem>>) attributes {dimension_semantics = [#tpu.dimension_semantics<parallel>], iteration_bounds = array<i64: 1>, scalar_prefetch = 0 : i64, scratch_operands = 0 : i64, tpu.core_type = #tpu.core_type<tc>, window_params = [{transform_indices = @transform_0, window_bounds = array<i64: 8, 256>}, {pipeline_mode = #tpu.pipeline_mode<synchronous>, transform_indices = @transform_1, window_bounds = array<i64: 256, 128>}, {transform_indices = @transform_2, window_bounds = array<i64: 8, 128>}]} {
    %c0 = arith.constant 0 : index
    %c0_0 = arith.constant 0 : index
    %0 = vector.load %arg1[%c0, %c0_0] : memref<8x256xf32, #tpu.memory_space<vmem>>, vector<8x256xf32>
    %1 = arith.mulf %0, %0 : vector<8x256xf32>
    %2 = arith.truncf %1 : vector<8x256xf32> to vector<8x256xbf16>
    %3 = arith.extf %2 : vector<8x256xbf16> to vector<8x256xf32>
    %4 = arith.subf %1, %3 : vector<8x256xf32>
    %5 = arith.truncf %4 : vector<8x256xf32> to vector<8x256xbf16>
    %6 = arith.extf %5 : vector<8x256xbf16> to vector<8x256xf32>
    %7 = arith.subf %4, %6 : vector<8x256xf32>
    %8 = arith.truncf %7 : vector<8x256xf32> to vector<8x256xbf16>
    %c0_1 = arith.constant 0 : index
    %c0_2 = arith.constant 0 : index
    %9 = vector.load %arg2[%c0_1, %c0_2] : memref<256x128xbf16, #tpu.memory_space<vmem>>, vector<256x128xbf16>
    %cst = arith.constant dense<0.000000e+00> : vector<8x128xf32>
    %10 = tpu.matmul %2, %9, %cst {dimension_numbers = #tpu.dot_dimension_numbers<[1], [0], [0], [1], [0, 0, 1, 1], [], []>} : vector<8x256xbf16>, vector<256x128xbf16>, vector<8x128xf32> -> vector<8x128xf32>
    %cst_3 = arith.constant dense<0.000000e+00> : vector<8x128xf32>
    %11 = tpu.matmul %5, %9, %cst_3 {dimension_numbers = #tpu.dot_dimension_numbers<[1], [0], [0], [1], [0, 0, 1, 1], [], []>} : vector<8x256xbf16>, vector<256x128xbf16>, vector<8x128xf32> -> vector<8x128xf32>
    %12 = arith.addf %10, %11 : vector<8x128xf32>
    %cst_4 = arith.constant dense<0.000000e+00> : vector<8x128xf32>
    %13 = tpu.matmul %8, %9, %cst_4 {dimension_numbers = #tpu.dot_dimension_numbers<[1], [0], [0], [1], [0, 0, 1, 1], [], []>} : vector<8x256xbf16>, vector<256x128xbf16>, vector<8x128xf32> -> vector<8x128xf32>
    %14 = arith.addf %12, %13 : vector<8x128xf32>
    %15 = math.absf %14 : vector<8x128xf32>
    %c0_5 = arith.constant 0 : index
    %c0_6 = arith.constant 0 : index
    %16 = vector.load %arg3[%c0_5, %c0_6] : memref<8x128xf32, #tpu.memory_space<vmem>>, vector<8x128xf32>
    tpu.vector_store %arg3[%c0_5, %c0_6], %15 {strides = array<i32>} : memref<8x128xf32, #tpu.memory_space<vmem>>, vector<8x128xf32>,
    return
  }
  func.func @transform_0(%arg0: i32) -> (i32, i32) {
    %c0_i32 = arith.constant 0 : i32
    %c0_i32_0 = arith.constant 0 : i32
    return %arg0, %c0_i32 : i32, i32
  }
  func.func @transform_1(%arg0: i32) -> (i32, i32) {
    %c0_i32 = arith.constant 0 : i32
    %c0_i32_0 = arith.constant 0 : i32
    %c0_i32_1 = arith.constant 0 : i32
    return %c0_i32, %c0_i32_0 : i32, i32
  }
  func.func @transform_2(%arg0: i32) -> (i32, i32) {
    %c0_i32 = arith.constant 0 : i32
    %c0_i32_0 = arith.constant 0 : i32
    return %arg0, %c0_i32 : i32, i32
  }
}

</mosaic_0001>

<llo_original>
// kernel: amplitude.1
$region0: #{amplitude.1}
  #allocation0 [shape = 'u32[]', space=smem, size = 0x4, offset = 0x4, fixed_abs, tag = 'smem constant byte address 0x4 - core index']
  #allocation1 [shape = 'u32[144,128]{1,0:T(1,128)}', space=vmem, size = 0x12000, scoped, tag = 'internal scratch']
  %s0 = inlined_call_operand.vmem [shape: f32[8,256], index: 0, kind: input, shape index: {}]
  %s1 = inlined_call_operand.vmem [shape: bf16[256,128], index: 1, kind: input, shape index: {}]
  %s2 = inlined_call_operand.vmem [shape: f32[8,128], index: 2, kind: output, shape index: {}]
  %s3 = sld [smem:[#allocation0]]
  $region18: #{amplitude.1} parent=0
    _
  %s5 = ssub.s32 1, %s3
  %s6 = scalar_select 0, %s5, %s3
  // Predicated region
  $region2: #{amplitude.1} parent=0 // pred_check
    _
  $region3: #{amplitude.1} parent=0 // pred_check_branch
    %8 = sbr.rel (0) target = $region5
  $region4: #{amplitude.1} parent=0 // pred_region
    _
  $region5: #{amplitude.1} parent=0 // pred_fallthru
    _
  // Predicated region
  $region6: #{amplitude.1} parent=0 // pred_check
    _
  $region7: #{amplitude.1} parent=0 // pred_check_branch
    %10 = sbr.rel (0) target = $region9
  $region8: #{amplitude.1} parent=0 // pred_region
    _
  $region9: #{amplitude.1} parent=0 // pred_fallthru
    _
  %v12 = vld [vmem:[%s0] sm:$0xff]
  %v13 = vld [vmem:[%s0 + $0x8] sm:$0xff]
  %v14 = vmul.f32 %v12, %v12
  %v15 = vmul.f32 %v13, %v13
  %v16 = vpack.c.bf16 %v14, %v14
  %v17 = vpack.c.bf16 %v15, %v15
  %v18 = vunpack.c.l.bf16 %v16
  %v19 = vunpack.c.l.bf16 %v17
  %v20 = vsub.f32 %v14, %v18
  %v21 = vsub.f32 %v15, %v19
  %v22 = vpack.c.bf16 %v20, %v20
  %v23 = vpack.c.bf16 %v21, %v21
  %v24 = vunpack.c.l.bf16 %v22
  %v25 = vunpack.c.l.bf16 %v23
  %v26 = vsub.f32 %v20, %v24
  %v27 = vsub.f32 %v21, %v25
  %v28 = vpack.c.bf16 %v26, %v26
  %v29 = vpack.c.bf16 %v27, %v27
  %v30 = vld [vmem:[%s1] sm:$0xf]
  %v31 = vld [vmem:[%s1 + $0x4] sm:$0xf]
  %v32 = vld [vmem:[%s1 + $0x8] sm:$0xf]
  %v33 = vld [vmem:[%s1 + $0xc] sm:$0xf]
  %v34 = vld [vmem:[%s1 + $0x10] sm:$0xf]
  %v35 = vld [vmem:[%s1 + $0x14] sm:$0xf]
  %v36 = vld [vmem:[%s1 + $0x18] sm:$0xf]
  %v37 = vld [vmem:[%s1 + $0x1c] sm:$0xf]
  %v38 = vld [vmem:[%s1 + $0x20] sm:$0xf]
  %v39 = vld [vmem:[%s1 + $0x24] sm:$0xf]
  %v40 = vld [vmem:[%s1 + $0x28] sm:$0xf]
  %v41 = vld [vmem:[%s1 + $0x2c] sm:$0xf]
  %v42 = vld [vmem:[%s1 + $0x30] sm:$0xf]
  %v43 = vld [vmem:[%s1 + $0x34] sm:$0xf]
  %v44 = vld [vmem:[%s1 + $0x38] sm:$0xf]
  %v45 = vld [vmem:[%s1 + $0x3c] sm:$0xf]
  %v46 = vld [vmem:[%s1 + $0x40] sm:$0xf]
  %v47 = vld [vmem:[%s1 + $0x44] sm:$0xf]
  %v48 = vld [vmem:[%s1 + $0x48] sm:$0xf]
  %v49 = vld [vmem:[%s1 + $0x4c] sm:$0xf]
  %v50 = vld [vmem:[%s1 + $0x50] sm:$0xf]
  %v51 = vld [vmem:[%s1 + $0x54] sm:$0xf]
  %v52 = vld [vmem:[%s1 + $0x58] sm:$0xf]
  %v53 = vld [vmem:[%s1 + $0x5c] sm:$0xf]
  %v54 = vld [vmem:[%s1 + $0x60] sm:$0xf]
  %v55 = vld [vmem:[%s1 + $0x64] sm:$0xf]
  %v56 = vld [vmem:[%s1 + $0x68] sm:$0xf]
  %v57 = vld [vmem:[%s1 + $0x6c] sm:$0xf]
  %v58 = vld [vmem:[%s1 + $0x70] sm:$0xf]
  %v59 = vld [vmem:[%s1 + $0x74] sm:$0xf]
  %v60 = vld [vmem:[%s1 + $0x78] sm:$0xf]
  %v61 = vld [vmem:[%s1 + $0x7c] sm:$0xf]
  %v94 = vunpack.c.l.b16 %v30
  %v95 = vunpack.c.l.b16 %v31
  %v96 = vunpack.c.l.b16 %v32
  %v97 = vunpack.c.l.b16 %v33
  %v98 = vunpack.c.l.b16 %v34
  %v99 = vunpack.c.l.b16 %v35
  %v100 = vunpack.c.l.b16 %v36
  %v101 = vunpack.c.l.b16 %v37
  %v102 = vunpack.c.l.b16 %v38
  %v103 = vunpack.c.l.b16 %v39
  %v104 = vunpack.c.l.b16 %v40
  %v105 = vunpack.c.l.b16 %v41
  %v106 = vunpack.c.l.b16 %v42
  %v107 = vunpack.c.l.b16 %v43
  %v108 = vunpack.c.l.b16 %v44
  %v109 = vunpack.c.l.b16 %v45
  %v110 = vunpack.c.l.b16 %v46
  %v111 = vunpack.c.l.b16 %v47
  %v112 = vunpack.c.l.b16 %v48
  %v113 = vunpack.c.l.b16 %v49
  %v114 = vunpack.c.l.b16 %v50
  %v115 = vunpack.c.l.b16 %v51
  %v116 = vunpack.c.l.b16 %v52
  %v117 = vunpack.c.l.b16 %v53
  %v118 = vunpack.c.l.b16 %v54
  %v119 = vunpack.c.l.b16 %v55
  %v120 = vunpack.c.l.b16 %v56
  %v121 = vunpack.c.l.b16 %v57
  %v122 = vunpack.c.l.b16 %v58
  %v123 = vunpack.c.l.b16 %v59
  %v124 = vunpack.c.l.b16 %v60
  %v125 = vunpack.c.l.b16 %v61
  %v126 = vpack.c.b16 %v95, %v94
  %v127 = vpack.c.b16 %v97, %v96
  %v128 = vpack.c.b16 %v99, %v98
  %v129 = vpack.c.b16 %v101, %v100
  %v130 = vpack.c.b16 %v103, %v102
  %v131 = vpack.c.b16 %v105, %v104
  %v132 = vpack.c.b16 %v107, %v106
  %v133 = vpack.c.b16 %v109, %v108
  %v134 = vpack.c.b16 %v111, %v110
  %v135 = vpack.c.b16 %v113, %v112
  %v136 = vpack.c.b16 %v115, %v114
  %v137 = vpack.c.b16 %v117, %v116
  %v138 = vpack.c.b16 %v119, %v118
  %v139 = vpack.c.b16 %v121, %v120
  %v140 = vpack.c.b16 %v123, %v122
  %v141 = vpack.c.b16 %v125, %v124
  %158 = vmatprep.subr.bf16.mxu0 0
  %159 = vmatpush1.bf16.msra.mxu0 %v133
  %160 = vmatprep.subr.bf16.mxu0 0
  %161 = vmatpush1.bf16.msra.mxu0 %v132
  %162 = vmatprep.subr.bf16.mxu0 0
  %163 = vmatpush1.bf16.msra.mxu0 %v131
  %164 = vmatprep.subr.bf16.mxu0 0
  %165 = vmatpush1.bf16.msra.mxu0 %v130
  %166 = vmatprep.subr.bf16.mxu0 0
  %167 = vmatpush1.bf16.msra.mxu0 %v129
  %168 = vmatprep.subr.bf16.mxu0 0
  %169 = vmatpush1.bf16.msra.mxu0 %v128
  %170 = vmatprep.subr.bf16.mxu0 0
  %171 = vmatpush1.bf16.msra.mxu0 %v127
  %172 = vmatprep.subr.bf16.mxu0 0
  %173 = vmatpush1.bf16.msra.mxu0 %v126
  %174 = vmatprep.subr.bf16.mxu0 0
  %175 = vmatpush2.bf16.msra.mxu0 %v141
  %176 = vmatprep.subr.bf16.mxu0 0
  %177 = vmatpush2.bf16.msra.mxu0 %v140
  %178 = vmatprep.subr.bf16.mxu0 0
  %179 = vmatpush2.bf16.msra.mxu0 %v139
  %180 = vmatprep.subr.bf16.mxu0 0
  %181 = vmatpush2.bf16.msra.mxu0 %v138
  %182 = vmatprep.subr.bf16.mxu0 0
  %183 = vmatpush2.bf16.msra.mxu0 %v137
  %184 = vmatprep.subr.bf16.mxu0 0
  %185 = vmatpush2.bf16.msra.mxu0 %v136
  %186 = vmatprep.subr.bf16.mxu0 0
  %187 = vmatpush2.bf16.msra.mxu0 %v135
  %188 = vmatprep.subr.bf16.mxu0 0
  %189 = vmatpush2.bf16.msra.mxu0 %v134
  %190 = vmatprep.mubr.bf16.mxu0 %v23
  %191 = vmatmul.mubr.bf16.gmra.mxu0 %v22
  %v192 = vpop.f32.mrf.mxu0
  %v193 = vadd.f32 0.0, %v192
  %v194 = vpop.f32.mrf.mxu0
  %v195 = vpop.f32.mrf.mxu0
  %v196 = vpop.f32.mrf.mxu0
  %197 = vdwg.mxu0
  %198 = vmatprep.subr.bf16.mxu0 0
  %199 = vmatpush1.bf16.msra.mxu0 %v133
  %200 = vmatprep.subr.bf16.mxu0 0
  %201 = vmatpush1.bf16.msra.mxu0 %v132
  %202 = vmatprep.subr.bf16.mxu0 0
  %203 = vmatpush1.bf16.msra.mxu0 %v131
  %204 = vmatprep.subr.bf16.mxu0 0
  %205 = vmatpush1.bf16.msra.mxu0 %v130
  %206 = vmatprep.subr.bf16.mxu0 0
  %207 = vmatpush1.bf16.msra.mxu0 %v129
  %208 = vmatprep.subr.bf16.mxu0 0
  %209 = vmatpush1.bf16.msra.mxu0 %v128
  %210 = vmatprep.subr.bf16.mxu0 0
  %211 = vmatpush1.bf16.msra.mxu0 %v127
  %212 = vmatprep.subr.bf16.mxu0 0
  %213 = vmatpush1.bf16.msra.mxu0 %v126
  %214 = vmatprep.subr.bf16.mxu0 0
  %215 = vmatpush2.bf16.msra.mxu0 %v141
  %216 = vmatprep.subr.bf16.mxu0 0
  %217 = vmatpush2.bf16.msra.mxu0 %v140
  %218 = vmatprep.subr.bf16.mxu0 0
  %219 = vmatpush2.bf16.msra.mxu0 %v139
  %220 = vmatprep.subr.bf16.mxu0 0
  %221 = vmatpush2.bf16.msra.mxu0 %v138
  %222 = vmatprep.subr.bf16.mxu0 0
  %223 = vmatpush2.bf16.msra.mxu0 %v137
  %224 = vmatprep.subr.bf16.mxu0 0
  %225 = vmatpush2.bf16.msra.mxu0 %v136
  %226 = vmatprep.subr.bf16.mxu0 0
  %227 = vmatpush2.bf16.msra.mxu0 %v135
  %228 = vmatprep.subr.bf16.mxu0 0
  %229 = vmatpush2.bf16.msra.mxu0 %v134
  %230 = vmatprep.mubr.bf16.mxu0 %v17
  %231 = vmatmul.mubr.bf16.gmra.mxu0 %v16
  %v232 = vpop.f32.mrf.mxu0
  %v233 = vadd.f32 %v193, %v232
  %v234 = vpop.f32.mrf.mxu0
  %v235 = vpop.f32.mrf.mxu0
  %v236 = vpop.f32.mrf.mxu0
  %237 = vdwg.mxu0
  %238 = vmatprep.subr.bf16.mxu0 0
  %239 = vmatpush1.bf16.msra.mxu0 %v133
  %240 = vmatprep.subr.bf16.mxu0 0
  %241 = vmatpush1.bf16.msra.mxu0 %v132
  %242 = vmatprep.subr.bf16.mxu0 0
  %243 = vmatpush1.bf16.msra.mxu0 %v131
  %244 = vmatprep.subr.bf16.mxu0 0
  %245 = vmatpush1.bf16.msra.mxu0 %v130
  %246 = vmatprep.subr.bf16.mxu0 0
  %247 = vmatpush1.bf16.msra.mxu0 %v129
  %248 = vmatprep.subr.bf16.mxu0 0
  %249 = vmatpush1.bf16.msra.mxu0 %v128
  %250 = vmatprep.subr.bf16.mxu0 0
  %251 = vmatpush1.bf16.msra.mxu0 %v127
  %252 = vmatprep.subr.bf16.mxu0 0
  %253 = vmatpush1.bf16.msra.mxu0 %v126
  %254 = vmatprep.subr.bf16.mxu0 0
  %255 = vmatpush2.bf16.msra.mxu0 %v141
  %256 = vmatprep.subr.bf16.mxu0 0
  %257 = vmatpush2.bf16.msra.mxu0 %v140
  %258 = vmatprep.subr.bf16.mxu0 0
  %259 = vmatpush2.bf16.msra.mxu0 %v139
  %260 = vmatprep.subr.bf16.mxu0 0
  %261 = vmatpush2.bf16.msra.mxu0 %v138
  %262 = vmatprep.subr.bf16.mxu0 0
  %263 = vmatpush2.bf16.msra.mxu0 %v137
  %264 = vmatprep.subr.bf16.mxu0 0
  %265 = vmatpush2.bf16.msra.mxu0 %v136
  %266 = vmatprep.subr.bf16.mxu0 0
  %267 = vmatpush2.bf16.msra.mxu0 %v135
  %268 = vmatprep.subr.bf16.mxu0 0
  %269 = vmatpush2.bf16.msra.mxu0 %v134
  %270 = vmatprep.mubr.bf16.mxu0 %v29
  %271 = vmatmul.mubr.bf16.gmra.mxu0 %v28
  %v272 = vpop.f32.mrf.mxu0
  %v273 = vadd.f32 0.0, %v272
  %v274 = vpop.f32.mrf.mxu0
  %v275 = vpop.f32.mrf.mxu0
  %v276 = vpop.f32.mrf.mxu0
  %277 = vdwg.mxu0
  %v278 = vadd.f32 %v233, %v273
  %v279 = vand.u32 2147483647, %v278
  %280 = vst [vmem:[%s2] sm:$0xff] %v279
  // Predicated region
  $region10: #{amplitude.1} parent=0 // pred_check
    _
  $region11: #{amplitude.1} parent=0 // pred_check_branch
    %282 = sbr.rel (0) target = $region13
  $region12: #{amplitude.1} parent=0 // pred_region
    _
  $region13: #{amplitude.1} parent=0 // pred_fallthru
    _
  // Predicated region
  $region14: #{amplitude.1} parent=0 // pred_check
    _
  $region15: #{amplitude.1} parent=0 // pred_check_branch
    %284 = sbr.rel (0) target = $region17
  $region16: #{amplitude.1} parent=0 // pred_region
    _
  $region17: #{amplitude.1} parent=0 // pred_fallthru
    _

</llo_original>
